<compile_context>
chip_gen: v7x
topology: tpu7x:2x2x1
jax: 0.10.0
libtpu: 0.0.40
codegen_flags: <defaults>
</compile_context>

<pallas_src>
import functools
import math

import jax
import jax.numpy as jnp
from jax import lax
from jax.experimental import pallas as pl
from jax.experimental.pallas import tpu as pltpu


def _round_up(x, m):
    return ((x + m - 1) // m) * m


_MAX_LANE_TILE = 2048          # lane-tile cap (lane-dense stores, few grid steps)
_SMALL_BYTES = 1 << 20         # below this, a fused XLA reduce beats pallas_call setup
_LANE_WIDTHS_1D = (2048, 1024, 512, 256, 128)


def _vmem_budget():
    """Per-input-buffer block byte budget and explicit scoped-VMEM limit.

    Worst case live VMEM ~= 2*block (double-buffered input) + 2*block (f32 upcast /
    masked temp for bf16 inputs) + small output/scratch, so block <= limit // 6.
    """
    cap = None
    try:
        cap = getattr(pltpu.get_tpu_info(), "vmem_capacity_bytes", None)
    except Exception:  # query unavailable -> conservative default
        cap = None
    if not cap or cap <= 0:
        cap = 64 << 20                       # conservative: v7x per-TC physical VMEM
    limit = min(int(cap) * 5 // 8, 48 << 20)  # 40 MiB on v7x (64 MiB), 48 MiB elsewhere
    block_bytes = min(limit // 6, 8 << 20)    # ~6.7 MiB on v7x, 8 MiB on v5e/v6e
    return block_bytes, limit


def _choose_tiles(B, C, itemsize, block_bytes):
    # dtype-native sublane multiple: 8 for f32, 16 for bf16/f16, 32 for int8/fp8.
    sub = max(8, 32 // itemsize)
    block_c = min(_round_up(C, 128), _MAX_LANE_TILE)
    # Guarantee >= 2 steps on the "parallel" lane axis whenever possible so the v7x
    # megacore can shard it across both TensorCores (one extra ~0.35us step elsewhere).
    if C > 128 and pl.cdiv(C, block_c) < 2:
        block_c = _round_up(pl.cdiv(C, 2), 128)
    max_elems = max(1, block_bytes // itemsize)
    max_rows = max(sub, (max_elems // block_c) // sub * sub)
    block_b = min(_round_up(B, sub), max_rows)
    return block_b, block_c


# --------------------------- 2-D (B, C) batch reduce --------------------------

def _make_batch_reduce_kernel(*, B, block_b, scale, acc_is_out):
    """Streaming sum over axis 0 with f32 accumulation.

    Column (lane) tail is NOT masked: out-of-bounds lanes of the last lane tile are
    never written back to the in-bounds region by Pallas, and the reduction never
    crosses lanes, so garbage lanes cannot contaminate valid output.
    """
    masked_tail = bool(B % block_b)

    def kernel(x_ref, out_ref, *scratch):
        acc_ref = out_ref if acc_is_out else scratch[0]
        jb = pl.program_id(1)           # batch-tile index (arbitrary, innermost)
        n_b = pl.num_programs(1)

        @pl.when(jb == 0)
        def _():
            acc_ref[...] = jnp.zeros_like(acc_ref)

        x = x_ref[...]
        if x.dtype != jnp.float32:
            x = x.astype(jnp.float32)

        if masked_tail:
            # Hot path: full batch tiles, no masking work at all.
            @pl.when(jb < n_b - 1)
            def _():
                acc_ref[...] += jnp.sum(x, axis=0, keepdims=True)

            # Tail tile only (runs once per lane tile): mask out-of-range rows.
            @pl.when(jb == n_b - 1)
            def _():
                rows = lax.broadcasted_iota(jnp.int32, x.shape, 0) + jb * block_b
                acc_ref[...] += jnp.sum(jnp.where(rows < B, x, 0.0),
                                        axis=0, keepdims=True)
        else:
            acc_ref[...] += jnp.sum(x, axis=0, keepdims=True)

        if (not acc_is_out) or scale != 1.0:
            @pl.when(jb == n_b - 1)
            def _():
                if acc_is_out:
                    out_ref[...] = out_ref[...] * scale
                else:
                    out_ref[...] = (acc_ref[...] * scale).astype(out_ref.dtype)

    return kernel


def _batch_reduce_2d(x, scale, out_dtype=None):
    """x: (B, C) -> (C,) = scale * sum over axis 0 (f32 accumulation)."""
    B, C = x.shape
    out_dtype = x.dtype if out_dtype is None else jnp.dtype(out_dtype)
    itemsize = jnp.dtype(x.dtype).itemsize
    block_bytes, vmem_limit = _vmem_budget()
    block_b, block_c = _choose_tiles(B, C, itemsize, block_bytes)
    n_b = pl.cdiv(B, block_b)
    n_c = pl.cdiv(C, block_c)

    # For f32 outputs, accumulate directly into the (VMEM-resident) output block and
    # skip the scratch buffer; keep an f32 scratch only for low-precision outputs.
    acc_is_out = out_dtype == jnp.float32
    scratch = [] if acc_is_out else [pltpu.VMEM((1, block_c), jnp.float32)]

    kernel = _make_batch_reduce_kernel(B=B, block_b=block_b, scale=scale,
                                       acc_is_out=acc_is_out)

    out = pl.pallas_call(
        kernel,
        out_shape=jax.ShapeDtypeStruct((1, C), out_dtype),
        grid_spec=pltpu.PrefetchScalarGridSpec(
            num_scalar_prefetch=0,
            grid=(n_c, n_b),
            in_specs=[pl.BlockSpec((block_b, block_c), lambda jc, jb: (jb, jc))],
            out_specs=pl.BlockSpec((1, block_c), lambda jc, jb: (0, jc)),
            scratch_shapes=scratch,
        ),
        compiler_params=pltpu.CompilerParams(
            dimension_semantics=("parallel", "arbitrary"),
            vmem_limit_bytes=vmem_limit),
        cost_estimate=pl.CostEstimate(
            flops=B * C, transcendentals=0,
            bytes_accessed=B * C * itemsize + C * jnp.dtype(out_dtype).itemsize),
    )(x)
    return out[0]


# ------------------------------ 1-D (B,) reduce -------------------------------

def _batch_reduce_1d(x, scale):
    """x: (B,) -> scalar = scale * sum over B, using a sublane-dense (rows, L) view."""
    (B,) = x.shape

    # Zero-copy case: B is a multiple of a lane width -> plain metadata reshape.
    for L in _LANE_WIDTHS_1D:
        if B % L == 0:
            lane_sums = _batch_reduce_2d(x.reshape(B // L, L), 1.0,
                                         out_dtype=jnp.float32)      # (L,) f32
            return (jnp.sum(lane_sums) * scale).astype(x.dtype)

    # Unaligned B: stream the (B//L)*L prefix through the 2-D kernel (sublane-dense)
    # and fold the short tail in with a tiny XLA reduce.
    # TODO(synk): the prefix slice may materialize one extra copy ahead of the custom
    # call for unaligned B; acceptable since this path only triggers for odd batch sizes.
    L = 1024
    rows = B // L
    if rows == 0:
        return (jnp.sum(x.astype(jnp.float32)) * scale).astype(x.dtype)
    main = rows * L
    lane_sums = _batch_reduce_2d(x[:main].reshape(rows, L), 1.0, out_dtype=jnp.float32)
    total = jnp.sum(lane_sums)
    if main < B:
        total = total + jnp.sum(x[main:].astype(jnp.float32))
    return (total * scale).astype(x.dtype)


# ----------------------------- module equivalent ------------------------------

def reduce_loss(loss, reduction="mean"):
    """JAX/Pallas equivalent of pytools' reduce_loss. loss: (), (B) or (B, C)."""
    loss = jnp.asarray(loss)
    if loss.ndim == 0 or reduction == "none":
        return loss
    if reduction not in ("mean", "sum"):
        raise ValueError(f"unknown reduction: {reduction}")

    B = loss.shape[0]
    scale = (1.0 / B) if reduction == "mean" else 1.0

    # Tiny losses: pallas_call setup + pipeline prologue dominate -> fused XLA reduce.
    if loss.size * jnp.dtype(loss.dtype).itemsize <= _SMALL_BYTES:
        red = jnp.sum(loss.astype(jnp.float32), axis=0) * scale
        return red.astype(loss.dtype)

    if loss.ndim == 1:
        return _batch_reduce_1d(loss, scale)                  # scalar ()
    if loss.ndim == 2:
        return _batch_reduce_2d(loss, scale)                  # (C,)
    # Reference module only documents (), (B), (B,C); generalize by flattening trailing dims.
    trailing = loss.shape[1:]
    flat = loss.reshape(B, math.prod(trailing))
    return _batch_reduce_2d(flat, scale).reshape(trailing)


class Loss:
    """Base class mirroring the PyTorch `Loss` module (device arg is a no-op in JAX)."""

    def __init__(self, reduction: str = "mean", device: str = "tpu"):
        self.device = device
        self.reduction = reduction

    def loss_fn(self, *args, **kwargs):
        # TODO(synk): loss_fn is abstract in the reference module (raises NotImplementedError);
        # subclasses must provide the per-sample loss.
        raise NotImplementedError

    def __call__(self, *args, **kwargs):
        return reduce_loss(self.loss_fn(*args, **kwargs), reduction=self.reduction)


class _IdentityLoss(Loss):
    """Minimal concrete subclass for testing: loss_fn passes the per-sample loss through."""

    def loss_fn(self, per_sample_loss):
        return per_sample_loss


# ----------------------------------- main -------------------------------------

if __name__ == "__main__":
    key = jax.random.PRNGKey(0)
    keys = jax.random.split(key, 8)

    def close(a, b, atol=1e-5, rtol=1e-5):
        a = jnp.asarray(a).astype(jnp.float32)
        b = jnp.asarray(b).astype(jnp.float32)
        return bool(jnp.allclose(a, b, atol=atol, rtol=rtol))

    ok = True

    # ---- tiny shapes -> XLA fallback path (below the 1 MiB Pallas threshold) ----
    B, C = 8, 32
    small_bc = jax.random.normal(keys[0], (B, C), jnp.float32)
    small_b = jax.random.normal(keys[1], (B,), jnp.float32)
    scalar = jnp.float32(3.25)

    out = jax.block_until_ready(_IdentityLoss("mean")(small_bc))
    ok &= out.shape == (C,) and close(out, jnp.mean(small_bc, axis=0))
    out = jax.block_until_ready(_IdentityLoss("sum")(small_bc))
    ok &= out.shape == (C,) and close(out, jnp.sum(small_bc, axis=0))
    out = jax.block_until_ready(_IdentityLoss("mean")(small_b))
    ok &= out.shape == () and close(out, jnp.mean(small_b))
    out = jax.block_until_ready(_IdentityLoss("none")(small_bc))
    ok &= out.shape == (B, C) and bool(jnp.array_equal(out, small_bc))
    out = jax.block_until_ready(_IdentityLoss("mean")(scalar))
    ok &= out.shape == () and close(out, scalar)
    x3 = jax.random.normal(keys[7], (4, 6, 10), jnp.float32)
    out = jax.block_until_ready(_IdentityLoss("mean")(x3))
    ok &= out.shape == (6, 10) and close(out, jnp.mean(x3, axis=0))

    # ---- Pallas kernel path: aligned (B, C) f32 (accumulates into out_ref) ----
    big = jax.random.normal(keys[2], (256, 2048), jnp.float32)
    out = jax.block_until_ready(_IdentityLoss("mean")(big))
    ok &= out.shape == (2048,) and close(out, jnp.mean(big, axis=0))
    out = jax.block_until_ready(_IdentityLoss("sum")(big))
    ok &= out.shape == (2048,) and close(out, jnp.sum(big, axis=0), atol=1e-3)

    # ---- Pallas kernel path: unaligned (B, C) f32 (row-tail mask, partial lane tile) ----
    big_u = jax.random.normal(keys[3], (300, 1030), jnp.float32)
    out = jax.block_until_ready(_IdentityLoss("mean")(big_u))
    ok &= out.shape == (1030,) and close(out, jnp.mean(big_u, axis=0))
    out = jax.block_until_ready(_IdentityLoss("sum")(big_u))
    ok &= out.shape == (1030,) and close(out, jnp.sum(big_u, axis=0), atol=1e-3)

    # ---- Pallas kernel path: bf16 input/output (f32 scratch accumulator) ----
    bf = jax.random.normal(keys[4], (512, 2048), jnp.float32).astype(jnp.bfloat16)
    out = jax.block_until_ready(_IdentityLoss("mean")(bf))
    ref = jnp.mean(bf.astype(jnp.float32), axis=0)
    ok &= out.shape == (2048,) and out.dtype == jnp.bfloat16 and close(
        out, ref, atol=2e-2, rtol=2e-2)

    # ---- Pallas kernel path: 1-D (B,) f32, aligned (zero-copy) and unaligned (tail) ----
    b1 = jax.random.normal(keys[5], (524288,), jnp.float32)      # multiple of 2048
    out = jax.block_until_ready(_IdentityLoss("mean")(b1))
    ok &= out.shape == () and close(out, jnp.mean(b1))
    b2 = jax.random.normal(keys[6], (300000,), jnp.float32)      # prefix + tail path
    out = jax.block_until_ready(_IdentityLoss("sum")(b2))
    ok &= out.shape == () and close(out, jnp.sum(b2), atol=1e-2, rtol=1e-5)

    if ok:
        print("KERNEL_OK")
    else:
        print("KERNEL_MISMATCH")
</pallas_src>

<mosaic_0001>
module attributes {stable_mosaic.version = 11 : i64} {
  func.func @kernel(%arg0: i32, %arg1: i32, %arg2: memref<256x1024xf32, #tpu.memory_space<vmem>>, %arg3: memref<1x1024xf32, #tpu.memory_space<vmem>>) attributes {dimension_semantics = [#tpu.dimension_semantics<parallel>, #tpu.dimension_semantics<arbitrary>], iteration_bounds = array<i64: 2, 1>, scalar_prefetch = 0 : i64, scratch_operands = 0 : i64, tpu.core_type = #tpu.core_type<tc>, window_params = [{transform_indices = @transform_0, window_bounds = array<i64: 256, 1024>}, {transform_indices = @transform_1, window_bounds = array<i64: 1, 1024>}]} {
    %c0_i32 = arith.constant 0 : i32
    %0 = arith.cmpi eq, %arg1, %c0_i32 : i32
    %1 = arith.extui %0 : i1 to i32
    %c0_i32_0 = arith.constant 0 : i32
    %2 = arith.cmpi ne, %1, %c0_i32_0 : i32
    scf.if %2 {
      %cst_8 = arith.constant 0.000000e+00 : f32
      %12 = vector.broadcast %cst_8 : f32 to vector<1x1024xf32>
      %c0_9 = arith.constant 0 : index
      %c0_10 = arith.constant 0 : index
      %13 = vector.load %arg3[%c0_9, %c0_10] : memref<1x1024xf32, #tpu.memory_space<vmem>>, vector<1x1024xf32>
      tpu.vector_store %arg3[%c0_9, %c0_10], %12 {strides = array<i32>} : memref<1x1024xf32, #tpu.memory_space<vmem>>, vector<1x1024xf32>,
    } else {
    }
    %c0 = arith.constant 0 : index
    %c0_1 = arith.constant 0 : index
    %3 = vector.load %arg2[%c0, %c0_1] : memref<256x1024xf32, #tpu.memory_space<vmem>>, vector<256x1024xf32>
    %c0_2 = arith.constant 0 : index
    %c0_3 = arith.constant 0 : index
    %4 = vector.load %arg3[%c0_2, %c0_3] : memref<1x1024xf32, #tpu.memory_space<vmem>>, vector<1x1024xf32>
    %cst = arith.constant dense<0.000000e+00> : vector<1024xf32>
    %5 = vector.multi_reduction <add>, %3, %cst [0] : vector<256x1024xf32> to vector<1024xf32>
    %6 = vector.shape_cast %5 : vector<1024xf32> to vector<1x1024xf32>
    %7 = arith.addf %4, %6 : vector<1x1024xf32>
    %c0_4 = arith.constant 0 : index
    %c0_5 = arith.constant 0 : index
    %8 = vector.load %arg3[%c0_4, %c0_5] : memref<1x1024xf32, #tpu.memory_space<vmem>>, vector<1x1024xf32>
    tpu.vector_store %arg3[%c0_4, %c0_5], %7 {strides = array<i32>} : memref<1x1024xf32, #tpu.memory_space<vmem>>, vector<1x1024xf32>,
    %c0_i32_6 = arith.constant 0 : i32
    %9 = arith.cmpi eq, %arg1, %c0_i32_6 : i32
    %10 = arith.extui %9 : i1 to i32
    %c0_i32_7 = arith.constant 0 : i32
    %11 = arith.cmpi ne, %10, %c0_i32_7 : i32
    scf.if %11 {
      %c0_8 = arith.constant 0 : index
      %c0_9 = arith.constant 0 : index
      %12 = vector.load %arg3[%c0_8, %c0_9] : memref<1x1024xf32, #tpu.memory_space<vmem>>, vector<1x1024xf32>
      %cst_10 = arith.constant 3.906250e-03 : f32
      %13 = vector.broadcast %cst_10 : f32 to vector<1x1024xf32>
      %14 = arith.mulf %12, %13 : vector<1x1024xf32>
      %c0_11 = arith.constant 0 : index
      %c0_12 = arith.constant 0 : index
      %15 = vector.load %arg3[%c0_11, %c0_12] : memref<1x1024xf32, #tpu.memory_space<vmem>>, vector<1x1024xf32>
      tpu.vector_store %arg3[%c0_11, %c0_12], %14 {strides = array<i32>} : memref<1x1024xf32, #tpu.memory_space<vmem>>, vector<1x1024xf32>,
    } else {
    }
    return
  }
  func.func @transform_0(%arg0: i32, %arg1: i32) -> (i32, i32) {
    %c0_i32 = arith.constant 0 : i32
    return %arg1, %arg0 : i32, i32
  }
  func.func @transform_1(%arg0: i32, %arg1: i32) -> (i32, i32) {
    %c0_i32 = arith.constant 0 : i32
    %c0_i32_0 = arith.constant 0 : i32
    return %c0_i32, %arg0 : i32, i32
  }
}

</mosaic_0001>

<llo_original>
// kernel: tpu_custom_call.1
$region0: #{tpu_custom_call.1}
  #allocation0 [shape = 'u32[]', space=smem, size = 0x4, offset = 0x4, fixed_abs, tag = 'smem constant byte address 0x4 - core index']
  #allocation1 [shape = 'u32[144,128]{1,0:T(1,128)}', space=vmem, size = 0x12000, scoped, tag = 'internal scratch']
  %s0 = inlined_call_operand.hbm [shape: f32[256,2048], index: 0, kind: input, shape index: {}]
  %s1 = inlined_call_operand.hbm [shape: f32[1,2048], index: 1, kind: output, shape index: {}]
  %s2 = sld [smem:[#allocation0]]
  $region49: #{tpu_custom_call.1} parent=0
    _
  %s4 = ssub.s32 1, %s2
  %s5 = scalar_select 0, %s4, %s2
  $region1: #{tpu_custom_call.1} parent=0
    #allocation2 [shape = 'u8[2097152]{0}', space=vmem, size = 0x200000, scoped, tag = 'input window, operand 0']
    #allocation3 [shape = 's32[2]{0}', space=sflag, size = 0x8, scoped, tag = 'scoped memory for tpu_custom_call.1']
    #allocation4 [shape = 's32[2]{0}', space=sflag, size = 0x8, scoped, tag = 'scoped memory for tpu_custom_call.1']
    #allocation5 [shape = 'u8[8192]{0}', space=vmem, size = 0x2000, scoped, tag = 'output window, operand 0']
    %6 = vsyncpa [#allocation3], 0
    %s7 = scalar_lea.sflag [#allocation3], 1
    %8 = vsyncpa %s7, 0
    %9 = vsyncpa [#allocation4], 0
    %s10 = scalar_lea.sflag [#allocation4], 1
    %11 = vsyncpa %s10, 0
    loop: start=0, step=1, limit=4
    $region2: #{tpu_custom_call.1} parent=1 // loop_pre_header
      _
    $region3: #{tpu_custom_call.1} parent=1 // loop_header
      %s13 = sphi 0, %s17
      %p14 = scmp.ge.s32.totalorder %s13, 4
      %s20 = sphi 0, %s32
      %s21 = sphi 0, %s28
      %s22 = sphi 0, %s20
      %s23 = sphi 0, %s21
      %s24 = sphi 0, %s22
      %s25 = sphi 0, %s23
      %s37 = sphi 0, %s39
      %s40 = sphi 0, %s37
      %s41 = sphi 0, %s40
      %s57 = sphi 0, %s41
      %s63 = sphi 0, %s65
      %s66 = sphi 0, %s63
      %s67 = sphi 0, %s66
      %s83 = sphi 0, %s67
    $region4: #{tpu_custom_call.1} parent=1 // loop_header_branch
      %16 = sbr.rel (%p14) target = $region8
    $region5: #{tpu_custom_call.1} parent=1 // loop_body
      %s18 = ssub.s32 %s13, 1
      %s19 = ssub.s32 %s13, 2
      %s26 = sadd.s32 1, %s21
      %p27 = scmp.ge.s32.totalorder %s26, 1
      %s28 = scalar_select %p27, 0, %s26
      %s29 = sadd.s32 1, %s20
      %s30 = scalar_select %p27, %s29, %s20
      %p31 = scmp.ge.s32.totalorder %s30, 2
      %s32 = scalar_select %p31, 0, %s30
      %s33 = ssub.s32 %s21, %s28
      %s34 = ssub.s32 %s20, %s32
      %s35 = sor.u32 %s33, %s34
      %p36 = scmp.eq.s32.totalorder %s35, 0
      %s38 = sadd.s32 %s37, 1
      %s39 = scalar_select %p36, %s37, %s38
      %p42 = pneg %p36
      %p43 = scmp.eq.s32.totalorder %s13, 1
      %p44 = por %p42, %p43
      %p45 = scmp.ne.s32.totalorder %s37, %s40
      %p46 = scmp.eq.s32.totalorder %s13, 0
      %p47 = por %p45, %p46
      %p48 = scmp.ne.s32.totalorder %s37, %s40
      %p49 = scmp.eq.s32.totalorder %s18, 1
      %p50 = por %p48, %p49
      %p51 = scmp.ne.s32.totalorder %s40, %s41
      %p52 = scmp.eq.s32.totalorder %s18, 0
      %p53 = por %p51, %p52
      %p54 = scmp.ne.s32.totalorder %s40, %s41
      %p55 = scmp.eq.s32.totalorder %s19, 1
      %p56 = por %p54, %p55
      %p58 = scmp.ne.s32.totalorder %s41, %s57
      %p59 = scmp.eq.s32.totalorder %s19, 0
      %p60 = por %p58, %p59
      %s61 = ssub.s32 %s20, %s32
      %p62 = scmp.eq.s32.totalorder %s61, 0
      %s64 = sadd.s32 %s63, 1
      %s65 = scalar_select %p62, %s63, %s64
      %p68 = pneg %p62
      %p69 = scmp.eq.s32.totalorder %s13, 1
      %p70 = por %p68, %p69
      %p71 = scmp.ne.s32.totalorder %s63, %s66
      %p72 = scmp.eq.s32.totalorder %s13, 0
      %p73 = por %p71, %p72
      %p74 = scmp.ne.s32.totalorder %s63, %s66
      %p75 = scmp.eq.s32.totalorder %s18, 1
      %p76 = por %p74, %p75
      %p77 = scmp.ne.s32.totalorder %s66, %s67
      %p78 = scmp.eq.s32.totalorder %s18, 0
      %p79 = por %p77, %p78
      %p80 = scmp.ne.s32.totalorder %s66, %s67
      %p81 = scmp.eq.s32.totalorder %s19, 1
      %p82 = por %p80, %p81
      %p84 = scmp.ne.s32.totalorder %s67, %s83
      %p85 = scmp.eq.s32.totalorder %s19, 0
      %p86 = por %p84, %p85
      %p87 = scmp.le.s32.totalorder 1, %s13
      %p88 = scmp.lt.s32.totalorder %s13, 3
      %p89 = pnand %p87, %p88
      %p90 = pneg %p89
      // Predicated region
      $region9: #{tpu_custom_call.1} parent=5 // pred_check
        _
      $region10: #{tpu_custom_call.1} parent=5 // pred_check_branch
        %92 = sbr.rel (%p89) target = $region12
      $region11: #{tpu_custom_call.1} parent=5 // pred_region
        %s93 = ssub.s32 %s13, 1
      $region12: #{tpu_custom_call.1} parent=5 // pred_fallthru
        _
      %p94 = scmp.lt.s32.totalorder %s13, 2
      // Predicated region
      $region13: #{tpu_custom_call.1} parent=5 // pred_check
        %p95 = pneg %p94
      $region14: #{tpu_custom_call.1} parent=5 // pred_check_branch
        %97 = sbr.rel (%p95) target = $region16
      $region15: #{tpu_custom_call.1} parent=5 // pred_region
        // Predicated region
        $region17: #{tpu_custom_call.1} parent=15 // pred_check
          %p98 = pneg %p47
        $region18: #{tpu_custom_call.1} parent=15 // pred_check_branch
          %100 = sbr.rel (%p98) target = $region20
        $region19: #{tpu_custom_call.1} parent=15 // pred_region
          %s101 = sand.u32 %s37, 1
          %s102 = scalar_lea.sflag [#allocation3], %s101
          %s103 = sand.u32 %s37, 1
          %s104 = smul.addr %s103, 2048
          %s105 = scalar_lea.vmem [#allocation2], %s104
          %s106 = smul.u32 32, %s21
          %s107 = smul.u32 8, %s20
          %s109 = ssub.s32 32768, 32768
          %110 = vsyncadd %s102, %s109
          %s111 = smul.addr %s106, 16
          %s112 = sadd.s32 %s107, %s111
          %s113 = smul.addr %s112, 128
          %s114 = scalar_lea.hbm %s0, %s113
          %s115 = sshll.u32 %s105, 4
          %s116 = int_to_ptr.vmem [resolvable:$true] %s115
          %121 = dma.hbm_to_vmem [thread:$0]  %s114, 32768, %s116, %s102, 2048, 1024, 64
        $region20: #{tpu_custom_call.1} parent=15 // pred_fallthru
          _
      $region16: #{tpu_custom_call.1} parent=5 // pred_fallthru
        _
      %p122 = scmp.le.s32.totalorder 1, %s13
      %p123 = scmp.lt.s32.totalorder %s13, 3
      %p124 = pnand %p122, %p123
      %p125 = pneg %p124
      // Predicated region
      $region21: #{tpu_custom_call.1} parent=5 // pred_check
        _
      $region22: #{tpu_custom_call.1} parent=5 // pred_check_branch
        %127 = sbr.rel (%p124) target = $region24
      $region23: #{tpu_custom_call.1} parent=5 // pred_region
        %s128 = ssub.s32 %s13, 1
        %s129 = sand.u32 %s40, 1
        %s130 = scalar_lea.sflag [#allocation3], %s129
        %s131 = sand.u32 %s40, 1
        %s132 = smul.addr %s131, 2048
        %s133 = scalar_lea.vmem [#allocation2], %s132
        // Predicated region
        $region25: #{tpu_custom_call.1} parent=23 // pred_check
          %p134 = pneg %p53
        $region26: #{tpu_custom_call.1} parent=23 // pred_check_branch
          %136 = sbr.rel (%p134) target = $region28
        $region27: #{tpu_custom_call.1} parent=23 // pred_region
          %137 = dma.done %s130, 32768
        $region28: #{tpu_custom_call.1} parent=23 // pred_fallthru
          _
        %s138 = sand.u32 %s40, 1
        %s139 = scalar_lea.sflag [#allocation3], %s138
        %s140 = sand.u32 %s40, 1
        %s141 = smul.addr %s140, 2048
        %s142 = scalar_lea.vmem [#allocation2], %s141
        %p143 = pneg %p53
        %p144 = pneg %p50
        %p145 = pneg %p79
        %p146 = pneg %p76
        %s147 = sand.u32 %s66, 1
        %s148 = scalar_lea.sflag [#allocation4], %s147
        %s149 = sand.u32 %s66, 1
        %s150 = smul.addr %s149, 8
        %s151 = scalar_lea.vmem [#allocation5], %s150
        %s152 = smul.u32 32, %s23
        %s153 = smul.u32 8, %s22
        %s154 = smul.u32 8, %s22
        %p155 = scmp.eq.s32.totalorder %s23, 0
        // Predicated region
        $region29: #{tpu_custom_call.1} parent=23 // pred_check
          %p156 = pneg %p155
        $region30: #{tpu_custom_call.1} parent=23 // pred_check_branch
          %158 = sbr.rel (%p156) target = $region32
        $region31: #{tpu_custom_call.1} parent=23 // pred_region
          %159 = vst [vmem:[%s151] sm:$0xff] 0.0
        $region32: #{tpu_custom_call.1} parent=23 // pred_fallthru
          _
        %v160 = vld [vmem:[%s133] sm:$0xff]
        %v161 = vld [vmem:[%s133 + $0x8] sm:$0xff]
        %v162 = vld [vmem:[%s133 + $0x10] sm:$0xff]
        %v163 = vld [vmem:[%s133 + $0x18] sm:$0xff]
        %v164 = vld [vmem:[%s133 + $0x20] sm:$0xff]
        %v165 = vld [vmem:[%s133 + $0x28] sm:$0xff]
        %v166 = vld [vmem:[%s133 + $0x30] sm:$0xff]
        %v167 = vld [vmem:[%s133 + $0x38] sm:$0xff]
        %v168 = vld [vmem:[%s133 + $0x40] sm:$0xff]
        %v169 = vld [vmem:[%s133 + $0x48] sm:$0xff]
        %v170 = vld [vmem:[%s133 + $0x50] sm:$0xff]
        %v171 = vld [vmem:[%s133 + $0x58] sm:$0xff]
        %v172 = vld [vmem:[%s133 + $0x60] sm:$0xff]
        %v173 = vld [vmem:[%s133 + $0x68] sm:$0xff]
        %v174 = vld [vmem:[%s133 + $0x70] sm:$0xff]
        %v175 = vld [vmem:[%s133 + $0x78] sm:$0xff]
        %v176 = vld [vmem:[%s133 + $0x80] sm:$0xff]
        %v177 = vld [vmem:[%s133 + $0x88] sm:$0xff]
        %v178 = vld [vmem:[%s133 + $0x90] sm:$0xff]
        %v179 = vld [vmem:[%s133 + $0x98] sm:$0xff]
        %v180 = vld [vmem:[%s133 + $0xa0] sm:$0xff]
        %v181 = vld [vmem:[%s133 + $0xa8] sm:$0xff]
        %v182 = vld [vmem:[%s133 + $0xb0] sm:$0xff]
        %v183 = vld [vmem:[%s133 + $0xb8] sm:$0xff]
        %v184 = vld [vmem:[%s133 + $0xc0] sm:$0xff]
        %v185 = vld [vmem:[%s133 + $0xc8] sm:$0xff]
        %v186 = vld [vmem:[%s133 + $0xd0] sm:$0xff]
        %v187 = vld [vmem:[%s133 + $0xd8] sm:$0xff]
        %v188 = vld [vmem:[%s133 + $0xe0] sm:$0xff]
        %v189 = vld [vmem:[%s133 + $0xe8] sm:$0xff]
        %v190 = vld [vmem:[%s133 + $0xf0] sm:$0xff]
        %v191 = vld [vmem:[%s133 + $0xf8] sm:$0xff]
        %v192 = vld [vmem:[%s133 + $0x100] sm:$0xff]
        %v193 = vld [vmem:[%s133 + $0x108] sm:$0xff]
        %v194 = vld [vmem:[%s133 + $0x110] sm:$0xff]
        %v195 = vld [vmem:[%s133 + $0x118] sm:$0xff]
        %v196 = vld [vmem:[%s133 + $0x120] sm:$0xff]
        %v197 = vld [vmem:[%s133 + $0x128] sm:$0xff]
        %v198 = vld [vmem:[%s133 + $0x130] sm:$0xff]
        %v199 = vld [vmem:[%s133 + $0x138] sm:$0xff]
        %v200 = vld [vmem:[%s133 + $0x140] sm:$0xff]
        %v201 = vld [vmem:[%s133 + $0x148] sm:$0xff]
        %v202 = vld [vmem:[%s133 + $0x150] sm:$0xff]
        %v203 = vld [vmem:[%s133 + $0x158] sm:$0xff]
        %v204 = vld [vmem:[%s133 + $0x160] sm:$0xff]
        %v205 = vld [vmem:[%s133 + $0x168] sm:$0xff]
        %v206 = vld [vmem:[%s133 + $0x170] sm:$0xff]
        %v207 = vld [vmem:[%s133 + $0x178] sm:$0xff]
        %v208 = vld [vmem:[%s133 + $0x180] sm:$0xff]
        %v209 = vld [vmem:[%s133 + $0x188] sm:$0xff]
        %v210 = vld [vmem:[%s133 + $0x190] sm:$0xff]
        %v211 = vld [vmem:[%s133 + $0x198] sm:$0xff]
        %v212 = vld [vmem:[%s133 + $0x1a0] sm:$0xff]
        %v213 = vld [vmem:[%s133 + $0x1a8] sm:$0xff]
        %v214 = vld [vmem:[%s133 + $0x1b0] sm:$0xff]
        %v215 = vld [vmem:[%s133 + $0x1b8] sm:$0xff]
        %v216 = vld [vmem:[%s133 + $0x1c0] sm:$0xff]
        %v217 = vld [vmem:[%s133 + $0x1c8] sm:$0xff]
        %v218 = vld [vmem:[%s133 + $0x1d0] sm:$0xff]
        %v219 = vld [vmem:[%s133 + $0x1d8] sm:$0xff]
        %v220 = vld [vmem:[%s133 + $0x1e0] sm:$0xff]
        %v221 = vld [vmem:[%s133 + $0x1e8] sm:$0xff]
        %v222 = vld [vmem:[%s133 + $0x1f0] sm:$0xff]
        %v223 = vld [vmem:[%s133 + $0x1f8] sm:$0xff]
        %v224 = vld [vmem:[%s133 + $0x200] sm:$0xff]
        %v225 = vld [vmem:[%s133 + $0x208] sm:$0xff]
        %v226 = vld [vmem:[%s133 + $0x210] sm:$0xff]
        %v227 = vld [vmem:[%s133 + $0x218] sm:$0xff]
        %v228 = vld [vmem:[%s133 + $0x220] sm:$0xff]
        %v229 = vld [vmem:[%s133 + $0x228] sm:$0xff]
        %v230 = vld [vmem:[%s133 + $0x230] sm:$0xff]
        %v231 = vld [vmem:[%s133 + $0x238] sm:$0xff]
        %v232 = vld [vmem:[%s133 + $0x240] sm:$0xff]
        %v233 = vld [vmem:[%s133 + $0x248] sm:$0xff]
        %v234 = vld [vmem:[%s133 + $0x250] sm:$0xff]
        %v235 = vld [vmem:[%s133 + $0x258] sm:$0xff]
        %v236 = vld [vmem:[%s133 + $0x260] sm:$0xff]
        %v237 = vld [vmem:[%s133 + $0x268] sm:$0xff]
        %v238 = vld [vmem:[%s133 + $0x270] sm:$0xff]
        %v239 = vld [vmem:[%s133 + $0x278] sm:$0xff]
        %v240 = vld [vmem:[%s133 + $0x280] sm:$0xff]
        %v241 = vld [vmem:[%s133 + $0x288] sm:$0xff]
        %v242 = vld [vmem:[%s133 + $0x290] sm:$0xff]
        %v243 = vld [vmem:[%s133 + $0x298] sm:$0xff]
        %v244 = vld [vmem:[%s133 + $0x2a0] sm:$0xff]
        %v245 = vld [vmem:[%s133 + $0x2a8] sm:$0xff]
        %v246 = vld [vmem:[%s133 + $0x2b0] sm:$0xff]
        %v247 = vld [vmem:[%s133 + $0x2b8] sm:$0xff]
        %v248 = vld [vmem:[%s133 + $0x2c0] sm:$0xff]
        %v249 = vld [vmem:[%s133 + $0x2c8] sm:$0xff]
        %v250 = vld [vmem:[%s133 + $0x2d0] sm:$0xff]
        %v251 = vld [vmem:[%s133 + $0x2d8] sm:$0xff]
        %v252 = vld [vmem:[%s133 + $0x2e0] sm:$0xff]
        %v253 = vld [vmem:[%s133 + $0x2e8] sm:$0xff]
        %v254 = vld [vmem:[%s133 + $0x2f0] sm:$0xff]
        %v255 = vld [vmem:[%s133 + $0x2f8] sm:$0xff]
        %v256 = vld [vmem:[%s133 + $0x300] sm:$0xff]
        %v257 = vld [vmem:[%s133 + $0x308] sm:$0xff]
        %v258 = vld [vmem:[%s133 + $0x310] sm:$0xff]
        %v259 = vld [vmem:[%s133 + $0x318] sm:$0xff]
        %v260 = vld [vmem:[%s133 + $0x320] sm:$0xff]
        %v261 = vld [vmem:[%s133 + $0x328] sm:$0xff]
        %v262 = vld [vmem:[%s133 + $0x330] sm:$0xff]
        %v263 = vld [vmem:[%s133 + $0x338] sm:$0xff]
        %v264 = vld [vmem:[%s133 + $0x340] sm:$0xff]
        %v265 = vld [vmem:[%s133 + $0x348] sm:$0xff]
        %v266 = vld [vmem:[%s133 + $0x350] sm:$0xff]
        %v267 = vld [vmem:[%s133 + $0x358] sm:$0xff]
        %v268 = vld [vmem:[%s133 + $0x360] sm:$0xff]
        %v269 = vld [vmem:[%s133 + $0x368] sm:$0xff]
        %v270 = vld [vmem:[%s133 + $0x370] sm:$0xff]
        %v271 = vld [vmem:[%s133 + $0x378] sm:$0xff]
        %v272 = vld [vmem:[%s133 + $0x380] sm:$0xff]
        %v273 = vld [vmem:[%s133 + $0x388] sm:$0xff]
        %v274 = vld [vmem:[%s133 + $0x390] sm:$0xff]
        %v275 = vld [vmem:[%s133 + $0x398] sm:$0xff]
        %v276 = vld [vmem:[%s133 + $0x3a0] sm:$0xff]
        %v277 = vld [vmem:[%s133 + $0x3a8] sm:$0xff]
        %v278 = vld [vmem:[%s133 + $0x3b0] sm:$0xff]
        %v279 = vld [vmem:[%s133 + $0x3b8] sm:$0xff]
        %v280 = vld [vmem:[%s133 + $0x3c0] sm:$0xff]
        %v281 = vld [vmem:[%s133 + $0x3c8] sm:$0xff]
        %v282 = vld [vmem:[%s133 + $0x3d0] sm:$0xff]
        %v283 = vld [vmem:[%s133 + $0x3d8] sm:$0xff]
        %v284 = vld [vmem:[%s133 + $0x3e0] sm:$0xff]
        %v285 = vld [vmem:[%s133 + $0x3e8] sm:$0xff]
        %v286 = vld [vmem:[%s133 + $0x3f0] sm:$0xff]
        %v287 = vld [vmem:[%s133 + $0x3f8] sm:$0xff]
        %v288 = vld [vmem:[%s133 + $0x400] sm:$0xff]
        %v289 = vld [vmem:[%s133 + $0x408] sm:$0xff]
        %v290 = vld [vmem:[%s133 + $0x410] sm:$0xff]
        %v291 = vld [vmem:[%s133 + $0x418] sm:$0xff]
        %v292 = vld [vmem:[%s133 + $0x420] sm:$0xff]
        %v293 = vld [vmem:[%s133 + $0x428] sm:$0xff]
        %v294 = vld [vmem:[%s133 + $0x430] sm:$0xff]
        %v295 = vld [vmem:[%s133 + $0x438] sm:$0xff]
        %v296 = vld [vmem:[%s133 + $0x440] sm:$0xff]
        %v297 = vld [vmem:[%s133 + $0x448] sm:$0xff]
        %v298 = vld [vmem:[%s133 + $0x450] sm:$0xff]
        %v299 = vld [vmem:[%s133 + $0x458] sm:$0xff]
        %v300 = vld [vmem:[%s133 + $0x460] sm:$0xff]
        %v301 = vld [vmem:[%s133 + $0x468] sm:$0xff]
        %v302 = vld [vmem:[%s133 + $0x470] sm:$0xff]
        %v303 = vld [vmem:[%s133 + $0x478] sm:$0xff]
        %v304 = vld [vmem:[%s133 + $0x480] sm:$0xff]
        %v305 = vld [vmem:[%s133 + $0x488] sm:$0xff]
        %v306 = vld [vmem:[%s133 + $0x490] sm:$0xff]
        %v307 = vld [vmem:[%s133 + $0x498] sm:$0xff]
        %v308 = vld [vmem:[%s133 + $0x4a0] sm:$0xff]
        %v309 = vld [vmem:[%s133 + $0x4a8] sm:$0xff]
        %v310 = vld [vmem:[%s133 + $0x4b0] sm:$0xff]
        %v311 = vld [vmem:[%s133 + $0x4b8] sm:$0xff]
        %v312 = vld [vmem:[%s133 + $0x4c0] sm:$0xff]
        %v313 = vld [vmem:[%s133 + $0x4c8] sm:$0xff]
        %v314 = vld [vmem:[%s133 + $0x4d0] sm:$0xff]
        %v315 = vld [vmem:[%s133 + $0x4d8] sm:$0xff]
        %v316 = vld [vmem:[%s133 + $0x4e0] sm:$0xff]
        %v317 = vld [vmem:[%s133 + $0x4e8] sm:$0xff]
        %v318 = vld [vmem:[%s133 + $0x4f0] sm:$0xff]
        %v319 = vld [vmem:[%s133 + $0x4f8] sm:$0xff]
        %v320 = vld [vmem:[%s133 + $0x500] sm:$0xff]
        %v321 = vld [vmem:[%s133 + $0x508] sm:$0xff]
        %v322 = vld [vmem:[%s133 + $0x510] sm:$0xff]
        %v323 = vld [vmem:[%s133 + $0x518] sm:$0xff]
        %v324 = vld [vmem:[%s133 + $0x520] sm:$0xff]
        %v325 = vld [vmem:[%s133 + $0x528] sm:$0xff]
        %v326 = vld [vmem:[%s133 + $0x530] sm:$0xff]
        %v327 = vld [vmem:[%s133 + $0x538] sm:$0xff]
        %v328 = vld [vmem:[%s133 + $0x540] sm:$0xff]
        %v329 = vld [vmem:[%s133 + $0x548] sm:$0xff]
        %v330 = vld [vmem:[%s133 + $0x550] sm:$0xff]
        %v331 = vld [vmem:[%s133 + $0x558] sm:$0xff]
        %v332 = vld [vmem:[%s133 + $0x560] sm:$0xff]
        %v333 = vld [vmem:[%s133 + $0x568] sm:$0xff]
        %v334 = vld [vmem:[%s133 + $0x570] sm:$0xff]
        %v335 = vld [vmem:[%s133 + $0x578] sm:$0xff]
        %v336 = vld [vmem:[%s133 + $0x580] sm:$0xff]
        %v337 = vld [vmem:[%s133 + $0x588] sm:$0xff]
        %v338 = vld [vmem:[%s133 + $0x590] sm:$0xff]
        %v339 = vld [vmem:[%s133 + $0x598] sm:$0xff]
        %v340 = vld [vmem:[%s133 + $0x5a0] sm:$0xff]
        %v341 = vld [vmem:[%s133 + $0x5a8] sm:$0xff]
        %v342 = vld [vmem:[%s133 + $0x5b0] sm:$0xff]
        %v343 = vld [vmem:[%s133 + $0x5b8] sm:$0xff]
        %v344 = vld [vmem:[%s133 + $0x5c0] sm:$0xff]
        %v345 = vld [vmem:[%s133 + $0x5c8] sm:$0xff]
        %v346 = vld [vmem:[%s133 + $0x5d0] sm:$0xff]
        %v347 = vld [vmem:[%s133 + $0x5d8] sm:$0xff]
        %v348 = vld [vmem:[%s133 + $0x5e0] sm:$0xff]
        %v349 = vld [vmem:[%s133 + $0x5e8] sm:$0xff]
        %v350 = vld [vmem:[%s133 + $0x5f0] sm:$0xff]
        %v351 = vld [vmem:[%s133 + $0x5f8] sm:$0xff]
        %v352 = vld [vmem:[%s133 + $0x600] sm:$0xff]
        %v353 = vld [vmem:[%s133 + $0x608] sm:$0xff]
        %v354 = vld [vmem:[%s133 + $0x610] sm:$0xff]
        %v355 = vld [vmem:[%s133 + $0x618] sm:$0xff]
        %v356 = vld [vmem:[%s133 + $0x620] sm:$0xff]
        %v357 = vld [vmem:[%s133 + $0x628] sm:$0xff]
        %v358 = vld [vmem:[%s133 + $0x630] sm:$0xff]
        %v359 = vld [vmem:[%s133 + $0x638] sm:$0xff]
        %v360 = vld [vmem:[%s133 + $0x640] sm:$0xff]
        %v361 = vld [vmem:[%s133 + $0x648] sm:$0xff]
        %v362 = vld [vmem:[%s133 + $0x650] sm:$0xff]
        %v363 = vld [vmem:[%s133 + $0x658] sm:$0xff]
        %v364 = vld [vmem:[%s133 + $0x660] sm:$0xff]
        %v365 = vld [vmem:[%s133 + $0x668] sm:$0xff]
        %v366 = vld [vmem:[%s133 + $0x670] sm:$0xff]
        %v367 = vld [vmem:[%s133 + $0x678] sm:$0xff]
        %v368 = vld [vmem:[%s133 + $0x680] sm:$0xff]
        %v369 = vld [vmem:[%s133 + $0x688] sm:$0xff]
        %v370 = vld [vmem:[%s133 + $0x690] sm:$0xff]
        %v371 = vld [vmem:[%s133 + $0x698] sm:$0xff]
        %v372 = vld [vmem:[%s133 + $0x6a0] sm:$0xff]
        %v373 = vld [vmem:[%s133 + $0x6a8] sm:$0xff]
        %v374 = vld [vmem:[%s133 + $0x6b0] sm:$0xff]
        %v375 = vld [vmem:[%s133 + $0x6b8] sm:$0xff]
        %v376 = vld [vmem:[%s133 + $0x6c0] sm:$0xff]
        %v377 = vld [vmem:[%s133 + $0x6c8] sm:$0xff]
        %v378 = vld [vmem:[%s133 + $0x6d0] sm:$0xff]
        %v379 = vld [vmem:[%s133 + $0x6d8] sm:$0xff]
        %v380 = vld [vmem:[%s133 + $0x6e0] sm:$0xff]
        %v381 = vld [vmem:[%s133 + $0x6e8] sm:$0xff]
        %v382 = vld [vmem:[%s133 + $0x6f0] sm:$0xff]
        %v383 = vld [vmem:[%s133 + $0x6f8] sm:$0xff]
        %v384 = vld [vmem:[%s133 + $0x700] sm:$0xff]
        %v385 = vld [vmem:[%s133 + $0x708] sm:$0xff]
        %v386 = vld [vmem:[%s133 + $0x710] sm:$0xff]
        %v387 = vld [vmem:[%s133 + $0x718] sm:$0xff]
        %v388 = vld [vmem:[%s133 + $0x720] sm:$0xff]
        %v389 = vld [vmem:[%s133 + $0x728] sm:$0xff]
        %v390 = vld [vmem:[%s133 + $0x730] sm:$0xff]
        %v391 = vld [vmem:[%s133 + $0x738] sm:$0xff]
        %v392 = vld [vmem:[%s133 + $0x740] sm:$0xff]
        %v393 = vld [vmem:[%s133 + $0x748] sm:$0xff]
        %v394 = vld [vmem:[%s133 + $0x750] sm:$0xff]
        %v395 = vld [vmem:[%s133 + $0x758] sm:$0xff]
        %v396 = vld [vmem:[%s133 + $0x760] sm:$0xff]
        %v397 = vld [vmem:[%s133 + $0x768] sm:$0xff]
        %v398 = vld [vmem:[%s133 + $0x770] sm:$0xff]
        %v399 = vld [vmem:[%s133 + $0x778] sm:$0xff]
        %v400 = vld [vmem:[%s133 + $0x780] sm:$0xff]
        %v401 = vld [vmem:[%s133 + $0x788] sm:$0xff]
        %v402 = vld [vmem:[%s133 + $0x790] sm:$0xff]
        %v403 = vld [vmem:[%s133 + $0x798] sm:$0xff]
        %v404 = vld [vmem:[%s133 + $0x7a0] sm:$0xff]
        %v405 = vld [vmem:[%s133 + $0x7a8] sm:$0xff]
        %v406 = vld [vmem:[%s133 + $0x7b0] sm:$0xff]
        %v407 = vld [vmem:[%s133 + $0x7b8] sm:$0xff]
        %v408 = vld [vmem:[%s133 + $0x7c0] sm:$0xff]
        %v409 = vld [vmem:[%s133 + $0x7c8] sm:$0xff]
        %v410 = vld [vmem:[%s133 + $0x7d0] sm:$0xff]
        %v411 = vld [vmem:[%s133 + $0x7d8] sm:$0xff]
        %v412 = vld [vmem:[%s133 + $0x7e0] sm:$0xff]
        %v413 = vld [vmem:[%s133 + $0x7e8] sm:$0xff]
        %v414 = vld [vmem:[%s133 + $0x7f0] sm:$0xff]
        %v415 = vld [vmem:[%s133 + $0x7f8] sm:$0xff]
        %v416 = vld [vmem:[%s151] sm:$0xff]
        %v417 = vadd.f32 %v160, %v168
        %v418 = vadd.f32 %v417, %v176
        %v419 = vadd.f32 %v418, %v184
        %v420 = vadd.f32 %v419, %v192
        %v421 = vadd.f32 %v420, %v200
        %v422 = vadd.f32 %v421, %v208
        %v423 = vadd.f32 %v422, %v216
        %v424 = vadd.f32 %v423, %v224
        %v425 = vadd.f32 %v424, %v232
        %v426 = vadd.f32 %v425, %v240
        %v427 = vadd.f32 %v426, %v248
        %v428 = vadd.f32 %v427, %v256
        %v429 = vadd.f32 %v428, %v264
        %v430 = vadd.f32 %v429, %v272
        %v431 = vadd.f32 %v430, %v280
        %v432 = vadd.f32 %v431, %v288
        %v433 = vadd.f32 %v432, %v296
        %v434 = vadd.f32 %v433, %v304
        %v435 = vadd.f32 %v434, %v312
        %v436 = vadd.f32 %v435, %v320
        %v437 = vadd.f32 %v436, %v328
        %v438 = vadd.f32 %v437, %v336
        %v439 = vadd.f32 %v438, %v344
        %v440 = vadd.f32 %v439, %v352
        %v441 = vadd.f32 %v440, %v360
        %v442 = vadd.f32 %v441, %v368
        %v443 = vadd.f32 %v442, %v376
        %v444 = vadd.f32 %v443, %v384
        %v445 = vadd.f32 %v444, %v392
        %v446 = vadd.f32 %v445, %v400
        %v447 = vadd.f32 %v446, %v408
        %v448 = vrot.slane %v447, 4
        %v449 = vadd.f32 %v447, %v448
        %v450 = vrot.slane %v449, 2
        %v451 = vadd.f32 %v449, %v450
        %v452 = vrot.slane %v451, 1
        %v453 = vadd.f32 %v451, %v452
        %v454 = vadd.f32 %v161, %v169
        %v455 = vadd.f32 %v454, %v177
        %v456 = vadd.f32 %v455, %v185
        %v457 = vadd.f32 %v456, %v193
        %v458 = vadd.f32 %v457, %v201
        %v459 = vadd.f32 %v458, %v209
        %v460 = vadd.f32 %v459, %v217
        %v461 = vadd.f32 %v460, %v225
        %v462 = vadd.f32 %v461, %v233
        %v463 = vadd.f32 %v462, %v241
        %v464 = vadd.f32 %v463, %v249
        %v465 = vadd.f32 %v464, %v257
        %v466 = vadd.f32 %v465, %v265
        %v467 = vadd.f32 %v466, %v273
        %v468 = vadd.f32 %v467, %v281
        %v469 = vadd.f32 %v468, %v289
        %v470 = vadd.f32 %v469, %v297
        %v471 = vadd.f32 %v470, %v305
        %v472 = vadd.f32 %v471, %v313
        %v473 = vadd.f32 %v472, %v321
        %v474 = vadd.f32 %v473, %v329
        %v475 = vadd.f32 %v474, %v337
        %v476 = vadd.f32 %v475, %v345
        %v477 = vadd.f32 %v476, %v353
        %v478 = vadd.f32 %v477, %v361
        %v479 = vadd.f32 %v478, %v369
        %v480 = vadd.f32 %v479, %v377
        %v481 = vadd.f32 %v480, %v385
        %v482 = vadd.f32 %v481, %v393
        %v483 = vadd.f32 %v482, %v401
        %v484 = vadd.f32 %v483, %v409
        %v485 = vrot.slane %v484, 4
        %v486 = vadd.f32 %v484, %v485
        %v487 = vrot.slane %v486, 2
        %v488 = vadd.f32 %v486, %v487
        %v489 = vrot.slane %v488, 1
        %v490 = vadd.f32 %v488, %v489
        %v491 = vadd.f32 %v162, %v170
        %v492 = vadd.f32 %v491, %v178
        %v493 = vadd.f32 %v492, %v186
        %v494 = vadd.f32 %v493, %v194
        %v495 = vadd.f32 %v494, %v202
        %v496 = vadd.f32 %v495, %v210
        %v497 = vadd.f32 %v496, %v218
        %v498 = vadd.f32 %v497, %v226
        %v499 = vadd.f32 %v498, %v234
        %v500 = vadd.f32 %v499, %v242
        %v501 = vadd.f32 %v500, %v250
        %v502 = vadd.f32 %v501, %v258
        %v503 = vadd.f32 %v502, %v266
        %v504 = vadd.f32 %v503, %v274
        %v505 = vadd.f32 %v504, %v282
        %v506 = vadd.f32 %v505, %v290
        %v507 = vadd.f32 %v506, %v298
        %v508 = vadd.f32 %v507, %v306
        %v509 = vadd.f32 %v508, %v314
        %v510 = vadd.f32 %v509, %v322
        %v511 = vadd.f32 %v510, %v330
        %v512 = vadd.f32 %v511, %v338
        %v513 = vadd.f32 %v512, %v346
        %v514 = vadd.f32 %v513, %v354
        %v515 = vadd.f32 %v514, %v362
        %v516 = vadd.f32 %v515, %v370
        %v517 = vadd.f32 %v516, %v378
        %v518 = vadd.f32 %v517, %v386
        %v519 = vadd.f32 %v518, %v394
        %v520 = vadd.f32 %v519, %v402
        %v521 = vadd.f32 %v520, %v410
        %v522 = vrot.slane %v521, 4
        %v523 = vadd.f32 %v521, %v522
        %v524 = vrot.slane %v523, 2
        %v525 = vadd.f32 %v523, %v524
        %v526 = vrot.slane %v525, 1
        %v527 = vadd.f32 %v525, %v526
        %v528 = vadd.f32 %v163, %v171
        %v529 = vadd.f32 %v528, %v179
        %v530 = vadd.f32 %v529, %v187
        %v531 = vadd.f32 %v530, %v195
        %v532 = vadd.f32 %v531, %v203
        %v533 = vadd.f32 %v532, %v211
        %v534 = vadd.f32 %v533, %v219
        %v535 = vadd.f32 %v534, %v227
        %v536 = vadd.f32 %v535, %v235
        %v537 = vadd.f32 %v536, %v243
        %v538 = vadd.f32 %v537, %v251
        %v539 = vadd.f32 %v538, %v259
        %v540 = vadd.f32 %v539, %v267
        %v541 = vadd.f32 %v540, %v275
        %v542 = vadd.f32 %v541, %v283
        %v543 = vadd.f32 %v542, %v291
        %v544 = vadd.f32 %v543, %v299
        %v545 = vadd.f32 %v544, %v307
        %v546 = vadd.f32 %v545, %v315
        %v547 = vadd.f32 %v546, %v323
        %v548 = vadd.f32 %v547, %v331
        %v549 = vadd.f32 %v548, %v339
        %v550 = vadd.f32 %v549, %v347
        %v551 = vadd.f32 %v550, %v355
        %v552 = vadd.f32 %v551, %v363
        %v553 = vadd.f32 %v552, %v371
        %v554 = vadd.f32 %v553, %v379
        %v555 = vadd.f32 %v554, %v387
        %v556 = vadd.f32 %v555, %v395
        %v557 = vadd.f32 %v556, %v403
        %v558 = vadd.f32 %v557, %v411
        %v559 = vrot.slane %v558, 4
        %v560 = vadd.f32 %v558, %v559
        %v561 = vrot.slane %v560, 2
        %v562 = vadd.f32 %v560, %v561
        %v563 = vrot.slane %v562, 1
        %v564 = vadd.f32 %v562, %v563
        %v565 = vadd.f32 %v164, %v172
        %v566 = vadd.f32 %v565, %v180
        %v567 = vadd.f32 %v566, %v188
        %v568 = vadd.f32 %v567, %v196
        %v569 = vadd.f32 %v568, %v204
        %v570 = vadd.f32 %v569, %v212
        %v571 = vadd.f32 %v570, %v220
        %v572 = vadd.f32 %v571, %v228
        %v573 = vadd.f32 %v572, %v236
        %v574 = vadd.f32 %v573, %v244
        %v575 = vadd.f32 %v574, %v252
        %v576 = vadd.f32 %v575, %v260
        %v577 = vadd.f32 %v576, %v268
        %v578 = vadd.f32 %v577, %v276
        %v579 = vadd.f32 %v578, %v284
        %v580 = vadd.f32 %v579, %v292
        %v581 = vadd.f32 %v580, %v300
        %v582 = vadd.f32 %v581, %v308
        %v583 = vadd.f32 %v582, %v316
        %v584 = vadd.f32 %v583, %v324
        %v585 = vadd.f32 %v584, %v332
        %v586 = vadd.f32 %v585, %v340
        %v587 = vadd.f32 %v586, %v348
        %v588 = vadd.f32 %v587, %v356
        %v589 = vadd.f32 %v588, %v364
        %v590 = vadd.f32 %v589, %v372
        %v591 = vadd.f32 %v590, %v380
        %v592 = vadd.f32 %v591, %v388
        %v593 = vadd.f32 %v592, %v396
        %v594 = vadd.f32 %v593, %v404
        %v595 = vadd.f32 %v594, %v412
        %v596 = vrot.slane %v595, 4
        %v597 = vadd.f32 %v595, %v596
        %v598 = vrot.slane %v597, 2
        %v599 = vadd.f32 %v597, %v598
        %v600 = vrot.slane %v599, 1
        %v601 = vadd.f32 %v599, %v600
        %v602 = vadd.f32 %v165, %v173
        %v603 = vadd.f32 %v602, %v181
        %v604 = vadd.f32 %v603, %v189
        %v605 = vadd.f32 %v604, %v197
        %v606 = vadd.f32 %v605, %v205
        %v607 = vadd.f32 %v606, %v213
        %v608 = vadd.f32 %v607, %v221
        %v609 = vadd.f32 %v608, %v229
        %v610 = vadd.f32 %v609, %v237
        %v611 = vadd.f32 %v610, %v245
        %v612 = vadd.f32 %v611, %v253
        %v613 = vadd.f32 %v612, %v261
        %v614 = vadd.f32 %v613, %v269
        %v615 = vadd.f32 %v614, %v277
        %v616 = vadd.f32 %v615, %v285
        %v617 = vadd.f32 %v616, %v293
        %v618 = vadd.f32 %v617, %v301
        %v619 = vadd.f32 %v618, %v309
        %v620 = vadd.f32 %v619, %v317
        %v621 = vadd.f32 %v620, %v325
        %v622 = vadd.f32 %v621, %v333
        %v623 = vadd.f32 %v622, %v341
        %v624 = vadd.f32 %v623, %v349
        %v625 = vadd.f32 %v624, %v357
        %v626 = vadd.f32 %v625, %v365
        %v627 = vadd.f32 %v626, %v373
        %v628 = vadd.f32 %v627, %v381
        %v629 = vadd.f32 %v628, %v389
        %v630 = vadd.f32 %v629, %v397
        %v631 = vadd.f32 %v630, %v405
        %v632 = vadd.f32 %v631, %v413
        %v633 = vrot.slane %v632, 4
        %v634 = vadd.f32 %v632, %v633
        %v635 = vrot.slane %v634, 2
        %v636 = vadd.f32 %v634, %v635
        %v637 = vrot.slane %v636, 1
        %v638 = vadd.f32 %v636, %v637
        %v639 = vadd.f32 %v166, %v174
        %v640 = vadd.f32 %v639, %v182
        %v641 = vadd.f32 %v640, %v190
        %v642 = vadd.f32 %v641, %v198
        %v643 = vadd.f32 %v642, %v206
        %v644 = vadd.f32 %v643, %v214
        %v645 = vadd.f32 %v644, %v222
        %v646 = vadd.f32 %v645, %v230
        %v647 = vadd.f32 %v646, %v238
        %v648 = vadd.f32 %v647, %v246
        %v649 = vadd.f32 %v648, %v254
        %v650 = vadd.f32 %v649, %v262
        %v651 = vadd.f32 %v650, %v270
        %v652 = vadd.f32 %v651, %v278
        %v653 = vadd.f32 %v652, %v286
        %v654 = vadd.f32 %v653, %v294
        %v655 = vadd.f32 %v654, %v302
        %v656 = vadd.f32 %v655, %v310
        %v657 = vadd.f32 %v656, %v318
        %v658 = vadd.f32 %v657, %v326
        %v659 = vadd.f32 %v658, %v334
        %v660 = vadd.f32 %v659, %v342
        %v661 = vadd.f32 %v660, %v350
        %v662 = vadd.f32 %v661, %v358
        %v663 = vadd.f32 %v662, %v366
        %v664 = vadd.f32 %v663, %v374
        %v665 = vadd.f32 %v664, %v382
        %v666 = vadd.f32 %v665, %v390
        %v667 = vadd.f32 %v666, %v398
        %v668 = vadd.f32 %v667, %v406
        %v669 = vadd.f32 %v668, %v414
        %v670 = vrot.slane %v669, 4
        %v671 = vadd.f32 %v669, %v670
        %v672 = vrot.slane %v671, 2
        %v673 = vadd.f32 %v671, %v672
        %v674 = vrot.slane %v673, 1
        %v675 = vadd.f32 %v673, %v674
        %v676 = vadd.f32 %v167, %v175
        %v677 = vadd.f32 %v676, %v183
        %v678 = vadd.f32 %v677, %v191
        %v679 = vadd.f32 %v678, %v199
        %v680 = vadd.f32 %v679, %v207
        %v681 = vadd.f32 %v680, %v215
        %v682 = vadd.f32 %v681, %v223
        %v683 = vadd.f32 %v682, %v231
        %v684 = vadd.f32 %v683, %v239
        %v685 = vadd.f32 %v684, %v247
        %v686 = vadd.f32 %v685, %v255
        %v687 = vadd.f32 %v686, %v263
        %v688 = vadd.f32 %v687, %v271
        %v689 = vadd.f32 %v688, %v279
        %v690 = vadd.f32 %v689, %v287
        %v691 = vadd.f32 %v690, %v295
        %v692 = vadd.f32 %v691, %v303
        %v693 = vadd.f32 %v692, %v311
        %v694 = vadd.f32 %v693, %v319
        %v695 = vadd.f32 %v694, %v327
        %v696 = vadd.f32 %v695, %v335
        %v697 = vadd.f32 %v696, %v343
        %v698 = vadd.f32 %v697, %v351
        %v699 = vadd.f32 %v698, %v359
        %v700 = vadd.f32 %v699, %v367
        %v701 = vadd.f32 %v700, %v375
        %v702 = vadd.f32 %v701, %v383
        %v703 = vadd.f32 %v702, %v391
        %v704 = vadd.f32 %v703, %v399
        %v705 = vadd.f32 %v704, %v407
        %v706 = vadd.f32 %v705, %v415
        %v707 = vrot.slane %v706, 4
        %v708 = vadd.f32 %v706, %v707
        %v709 = vrot.slane %v708, 2
        %v710 = vadd.f32 %v708, %v709
        %v711 = vrot.slane %v710, 1
        %v712 = vadd.f32 %v710, %v711
        %v721 = vcombine.low %v453, %v490
        %v722 = vcombine.low %v527, %v564
        %v723 = vcombine.low %v601, %v638
        %v724 = vcombine.low %v675, %v712
        %v726 = vunpack.c.l.s4 1966171168
        %v727 = vunpack.c.0.s8 %v726
        %v728 = vlaneseq
        %v729 = vshrl.u32 %v728, 7
        %v730 = vsub.s32 %v727, %v729
        %v731 = vrot.slane %v721, %v730
        %v733 = vunpack.c.l.s4 1966171168
        %v734 = vunpack.c.0.s8 %v733
        %v735 = vlaneseq
        %v736 = vshrl.u32 %v735, 7
        %v737 = vsub.s32 %v734, %v736
        %v738 = vrot.slane %v722, %v737
        %v740 = vunpack.c.l.s4 1966171168
        %v741 = vunpack.c.0.s8 %v740
        %v742 = vlaneseq
        %v743 = vshrl.u32 %v742, 7
        %v744 = vsub.s32 %v741, %v743
        %v745 = vrot.slane %v723, %v744
        %v747 = vunpack.c.l.s4 1966171168
        %v748 = vunpack.c.0.s8 %v747
        %v749 = vlaneseq
        %v750 = vshrl.u32 %v749, 7
        %v751 = vsub.s32 %v748, %v750
        %v752 = vrot.slane %v724, %v751
        %v753 = vcombine.low %v731, %v738
        %v754 = vcombine.low %v745, %v752
        %v756 = vunpack.c.l.s4 1966171168
        %v757 = vunpack.c.0.s8 %v756
        %v758 = vlaneseq
        %v759 = vshrl.u32 %v758, 7
        %v760 = vsub.s32 %v757, %v759
        %v761 = vrot.slane %v753, %v760
        %v763 = vunpack.c.l.s4 1966171168
        %v764 = vunpack.c.0.s8 %v763
        %v765 = vlaneseq
        %v766 = vshrl.u32 %v765, 7
        %v767 = vsub.s32 %v764, %v766
        %v768 = vrot.slane %v754, %v767
        %v769 = vcombine.low %v761, %v768
        %v771 = vadd.f32 %v416, %v769
        %772 = vst [vmem:[%s151] sm:$0xff] %v771
        // Predicated region
        $region33: #{tpu_custom_call.1} parent=23 // pred_check
          %p773 = pneg %p155
        $region34: #{tpu_custom_call.1} parent=23 // pred_check_branch
          %775 = sbr.rel (%p773) target = $region36
        $region35: #{tpu_custom_call.1} parent=23 // pred_region
          %v776 = vld [vmem:[%s151] sm:$0xff]
          %v777 = vmul.f32 %v776, 0.00390625
          %778 = vst [vmem:[%s151] sm:$0xff] %v777
        $region36: #{tpu_custom_call.1} parent=23 // pred_fallthru
          _
        %s779 = sand.u32 %s66, 1
        %s780 = scalar_lea.sflag [#allocation4], %s779
        %s781 = sand.u32 %s66, 1
        %s782 = smul.addr %s781, 8
        %s783 = scalar_lea.vmem [#allocation5], %s782
        // Predicated region
        $region37: #{tpu_custom_call.1} parent=23 // pred_check
          %p784 = pneg %p76
        $region38: #{tpu_custom_call.1} parent=23 // pred_check_branch
          %786 = sbr.rel (%p784) target = $region40
        $region39: #{tpu_custom_call.1} parent=23 // pred_region
          %s787 = smul.u32 8, %s22
          %s789 = ssub.s32 128, 128
          %790 = vsyncadd %s780, %s789
          %s791 = smul.addr %s787, 16
          %s792 = scalar_lea.hbm %s1, %s791
          %s794 = sshll.u32 %s783, 4
          %s795 = int_to_ptr.vmem [resolvable:$true] %s794
          %797 = dma.vmem_to_hbm [thread:$0]  %s795, 128, %s792, %s780
        $region40: #{tpu_custom_call.1} parent=23 // pred_fallthru
          _
      $region24: #{tpu_custom_call.1} parent=5 // pred_fallthru
        _
      %p798 = scmp.le.s32.totalorder 2, %s13
      // Predicated region
      $region41: #{tpu_custom_call.1} parent=5 // pred_check
        %p799 = pneg %p798
      $region42: #{tpu_custom_call.1} parent=5 // pred_check_branch
        %801 = sbr.rel (%p799) target = $region44
      $region43: #{tpu_custom_call.1} parent=5 // pred_region
        %s802 = ssub.s32 %s13, 2
        // Predicated region
        $region45: #{tpu_custom_call.1} parent=43 // pred_check
          %p803 = pneg %p82
        $region46: #{tpu_custom_call.1} parent=43 // pred_check_branch
          %805 = sbr.rel (%p803) target = $region48
        $region47: #{tpu_custom_call.1} parent=43 // pred_region
          %s806 = sand.u32 %s67, 1
          %s807 = scalar_lea.sflag [#allocation4], %s806
          %s808 = sand.u32 %s67, 1
          %s809 = smul.addr %s808, 8
          %s810 = scalar_lea.vmem [#allocation5], %s809
          %811 = dma.done %s807, 128
        $region48: #{tpu_custom_call.1} parent=43 // pred_fallthru
          _
      $region44: #{tpu_custom_call.1} parent=5 // pred_fallthru
        _
    $region6: #{tpu_custom_call.1} parent=1 // loop_footer
      %s17 = sadd.s32 1, %s13
    $region7: #{tpu_custom_call.1} parent=1 // loop_footer_branch
      %12 = sbr.rel target = $region3
    $region8: #{tpu_custom_call.1} parent=1 // loop_exit
      _
    %812 = vsyncpa [#allocation3], 1
    %s813 = scalar_lea.sflag [#allocation3], 1
    %814 = vsyncpa %s813, 1
    %815 = vsyncpa [#allocation4], 1
    %s816 = scalar_lea.sflag [#allocation4], 1
    %817 = vsyncpa %s816, 1

</llo_original>
